<compile_context>
chip_gen: v6e
topology: v6e:2x2x1
jax: 0.10.0
libtpu: 0.0.40
codegen_flags: <defaults>
</compile_context>

<pallas_src>
import functools

import numpy as np

import jax
import jax.numpy as jnp
from jax.experimental import pallas as pl
from jax.experimental.pallas import tpu as pltpu

_LANE = 128


def _round_up(x, m):
    return (x + m - 1) // m * m


# -----------------------------------------------------------------------------
# pltpu.roll shift-convention probe (run once, eagerly, before tracing).
# The conv taps need rolled[p] == x[p + off] exactly; the probe makes the tap
# construction robust to either sign convention of the rotate lowering.
# -----------------------------------------------------------------------------
_ROLL_SIGN = None


def _probe_roll_sign():
    def kern(x_ref, o_ref):
        o_ref[...] = pltpu.roll(x_ref[...], 1, axis=1)

    x = jnp.arange(8 * _LANE, dtype=jnp.float32).reshape(8, _LANE)
    y = pl.pallas_call(
        kern, out_shape=jax.ShapeDtypeStruct((8, _LANE), jnp.float32))(x)
    first = int(jax.device_get(y)[0, 0])
    if first == _LANE - 1:     # jnp.roll semantics: roll(x, s)[p] == x[p - s]
        return 1
    if first == 1:             # opposite convention
        return -1
    raise RuntimeError(f"unexpected pltpu.roll semantics (probe={first})")


def _get_roll_sign():
    global _ROLL_SIGN
    if _ROLL_SIGN is None:
        _ROLL_SIGN = _probe_roll_sign()
    return _ROLL_SIGN


def _shift_amount(off, length):
    """Static roll amount s so that pltpu.roll(x, s, axis=1)[p] == x[p + off]."""
    return (_get_roll_sign() * (-off)) % length


# =============================================================================
# Pallas kernels.  Activations: (channels, Mp) f32, lane-padded.  Weights and
# folded-BN scale/bias: 1-D f32 arrays in SMEM, consumed as scalar broadcasts.
# =============================================================================
def _resblock_kernel(x_ref, mask_ref,
                     s1_ref, b1_ref, w1_ref,
                     s2_ref, b2_ref, w2_ref,
                     s3_ref, b3_ref, w3_ref,
                     o_ref, *, C, Cmid, shifts):
    """Fused pre-activated bottleneck ResBlock:
    o = x + 1x1(relu(bn(3x3(relu(bn(1x1(relu(bn(x)))))))))."""
    x_rows = [x_ref[c:c + 1, :] for c in range(C)]

    # --- conv1: BN + ReLU + 1x1 (C -> Cmid), VPU scalar-broadcast FMAs -------
    a1 = [jnp.maximum(x_rows[c] * s1_ref[c] + b1_ref[c], 0.0) for c in range(C)]
    y1 = []
    for co in range(Cmid):
        acc = a1[0] * w1_ref[co]
        for ci in range(1, C):
            acc = acc + a1[ci] * w1_ref[ci * Cmid + co]
        y1.append(acc)

    # --- conv2: BN + ReLU + 3x3 (pad 1) via 9 shifted, masked taps -----------
    a2 = [jnp.maximum(y1[c] * s2_ref[c] + b2_ref[c], 0.0) for c in range(Cmid)]
    y2 = [None] * Cmid
    for t in range(9):
        m = mask_ref[t:t + 1, :]
        for ci in range(Cmid):
            src = a2[ci]
            if shifts[t]:
                src = pltpu.roll(src, shifts[t], axis=1)
            tap = src * m
            for co in range(Cmid):
                contrib = tap * w2_ref[(t * Cmid + ci) * Cmid + co]
                y2[co] = contrib if y2[co] is None else y2[co] + contrib

    # --- conv3: BN + ReLU + 1x1 (Cmid -> C), residual add fused in epilogue --
    a3 = [jnp.maximum(y2[c] * s3_ref[c] + b3_ref[c], 0.0) for c in range(Cmid)]
    for co in range(C):
        acc = a3[0] * w3_ref[co]
        for ci in range(1, Cmid):
            acc = acc + a3[ci] * w3_ref[ci * C + co]
        o_ref[co:co + 1, :] = acc + x_rows[co]


def _maxpool_kernel(x_ref, mask_ref, sel_ref, o_ref, *, shifts):
    """3x3 / stride-2 / pad-1 max pool: 9 shifted maxima at full resolution,
    then a 0/1 selection matmul for the stride-2 subsample (input read once)."""
    x = x_ref[...]
    m = None
    for t in range(9):
        msk = mask_ref[t:t + 1, :]
        src = pltpu.roll(x, shifts[t], axis=1) if shifts[t] else x
        tap = src * msk + (msk - 1.0) * 1e30      # invalid taps -> -1e30
        m = tap if m is None else jnp.maximum(m, tap)
    o_ref[...] = jnp.dot(m, sel_ref[...], preferred_element_type=jnp.float32)


def _interp_add2_kernel(lo_ref, u_ref, a_ref, b_ref, o_ref):
    """Bilinear upsample (align_corners=True, precomputed matrix) fused with
    the two residual adds of the attention-mask path."""
    up = jnp.dot(lo_ref[...], u_ref[...], preferred_element_type=jnp.float32)
    o_ref[...] = up + a_ref[...] + b_ref[...]


def _interp_gate_kernel(lo_ref, u_ref, trunk_ref,
                        s1_ref, b1_ref, w1_ref,
                        s2_ref, b2_ref, w2_ref,
                        o_ref, *, C):
    """Fused tail of the mask branch:
    (1 + sigmoid(pre1x1(pre1x1(upsample(lo) + trunk)))) * trunk."""
    up = jnp.dot(lo_ref[...], u_ref[...], preferred_element_type=jnp.float32)
    t_rows = [up[c:c + 1, :] + trunk_ref[c:c + 1, :] for c in range(C)]

    a1 = [jnp.maximum(t_rows[c] * s1_ref[c] + b1_ref[c], 0.0) for c in range(C)]
    h = []
    for co in range(C):
        acc = a1[0] * w1_ref[co]
        for ci in range(1, C):
            acc = acc + a1[ci] * w1_ref[ci * C + co]
        h.append(acc)

    a2 = [jnp.maximum(h[c] * s2_ref[c] + b2_ref[c], 0.0) for c in range(C)]
    for co in range(C):
        acc = a2[0] * w2_ref[co]
        for ci in range(1, C):
            acc = acc + a2[ci] * w2_ref[ci * C + co]
        o_ref[co:co + 1, :] = (1.0 + jax.nn.sigmoid(acc)) * trunk_ref[co:co + 1, :]


# =============================================================================
# pallas_call wrappers (single grid step: the whole problem fits in VMEM).
# =============================================================================
def _vmem_spec(shape):
    return pl.BlockSpec(shape, lambda i: (0,) * len(shape))


_SMEM = pl.BlockSpec(memory_space=pltpu.MemorySpace.SMEM)


def _res_block(x, blk, masks, shifts, C, Cmid):
    Mp = x.shape[1]
    kern = functools.partial(_resblock_kernel, C=C, Cmid=Cmid, shifts=shifts)
    return pl.pallas_call(
        kern,
        out_shape=jax.ShapeDtypeStruct((C, Mp), jnp.float32),
        grid=(1,),
        in_specs=[_vmem_spec((C, Mp)), _vmem_spec((9, Mp))] + [_SMEM] * 9,
        out_specs=_vmem_spec((C, Mp)),
    )(x, masks,
      blk["c1"]["s"], blk["c1"]["b"], blk["c1"]["w"],
      blk["c2"]["s"], blk["c2"]["b"], blk["c2"]["w"],
      blk["c3"]["s"], blk["c3"]["b"], blk["c3"]["w"])


def _max_pool(x, masks, sel, shifts, C):
    Mp_in, Mp_out = x.shape[1], sel.shape[1]
    kern = functools.partial(_maxpool_kernel, shifts=shifts)
    return pl.pallas_call(
        kern,
        out_shape=jax.ShapeDtypeStruct((C, Mp_out), jnp.float32),
        grid=(1,),
        in_specs=[_vmem_spec((C, Mp_in)), _vmem_spec((9, Mp_in)),
                  _vmem_spec((Mp_in, Mp_out))],
        out_specs=_vmem_spec((C, Mp_out)),
    )(x, masks, sel)


def _interp_add2(lo, U, a, b, C):
    Mp_lo, Mp_hi = lo.shape[1], U.shape[1]
    return pl.pallas_call(
        _interp_add2_kernel,
        out_shape=jax.ShapeDtypeStruct((C, Mp_hi), jnp.float32),
        grid=(1,),
        in_specs=[_vmem_spec((C, Mp_lo)), _vmem_spec((Mp_lo, Mp_hi)),
                  _vmem_spec((C, Mp_hi)), _vmem_spec((C, Mp_hi))],
        out_specs=_vmem_spec((C, Mp_hi)),
    )(lo, U, a, b)


def _interp_gate(lo, U, trunk, p1, p2, C):
    Mp_lo, Mp_hi = lo.shape[1], U.shape[1]
    kern = functools.partial(_interp_gate_kernel, C=C)
    return pl.pallas_call(
        kern,
        out_shape=jax.ShapeDtypeStruct((C, Mp_hi), jnp.float32),
        grid=(1,),
        in_specs=[_vmem_spec((C, Mp_lo)), _vmem_spec((Mp_lo, Mp_hi)),
                  _vmem_spec((C, Mp_hi))] + [_SMEM] * 6,
        out_specs=_vmem_spec((C, Mp_hi)),
    )(lo, U, trunk, p1["s"], p1["b"], p1["w"], p2["s"], p2["b"], p2["w"])


# =============================================================================
# Trace-time constants: tap masks, pool-selection and bilinear-interpolation
# matrices (tiny, built with numpy once per shape).
# =============================================================================
def _tap_offsets(W):
    return tuple((kh - 1) * W + (kw - 1) for kh in range(3) for kw in range(3))


def _tap_shifts(W, Mp):
    return tuple(_shift_amount(off, Mp) for off in _tap_offsets(W))


def _tap_masks(N, H, W, Mp):
    hh, ww = np.arange(H), np.arange(W)
    out = np.zeros((9, Mp), np.float32)
    t = 0
    for kh in range(3):
        for kw in range(3):
            dh, dw = kh - 1, kw - 1
            mh = ((hh + dh >= 0) & (hh + dh < H)).astype(np.float32)
            mw = ((ww + dw >= 0) & (ww + dw < W)).astype(np.float32)
            m = np.broadcast_to(mh[None, :, None] * mw[None, None, :], (N, H, W))
            out[t, :N * H * W] = m.reshape(-1)
            t += 1
    return jnp.asarray(out)


def _pool_select(N, H, W, Mp_in, Mp_out):
    OH, OW = (H - 1) // 2 + 1, (W - 1) // 2 + 1
    S = np.zeros((Mp_in, Mp_out), np.float32)
    for n in range(N):
        for oh in range(OH):
            for ow in range(OW):
                S[(n * H + 2 * oh) * W + 2 * ow, (n * OH + oh) * OW + ow] = 1.0
    return jnp.asarray(S)


def _interp_matrix_1d(out_size, in_size):
    # bilinear, align_corners=True (out_size==1 samples index 0, like PyTorch)
    m = np.zeros((out_size, in_size), np.float64)
    if out_size == 1 or in_size == 1:
        m[:, 0] = 1.0
        return m
    src = np.arange(out_size, dtype=np.float64) * (in_size - 1) / (out_size - 1)
    lo = np.clip(np.floor(src).astype(np.int64), 0, in_size - 2)
    frac = src - lo
    m[np.arange(out_size), lo] += 1.0 - frac
    m[np.arange(out_size), lo + 1] += frac
    return m


def _upsample_matrix(N, h_in, w_in, h_out, w_out, Mp_in, Mp_out):
    K = np.kron(_interp_matrix_1d(h_out, h_in), _interp_matrix_1d(w_out, w_in))
    U = np.zeros((Mp_in, Mp_out), np.float32)
    Pin, Pout = h_in * w_in, h_out * w_out
    for n in range(N):
        U[n * Pin:(n + 1) * Pin, n * Pout:(n + 1) * Pout] = K.T
    return jnp.asarray(U)


# =============================================================================
# Full AttentionModule_stage1 forward (3 pools, 2 skips, 3 upsamples).
# =============================================================================
def attention_module_stage1(x_nchw, params):
    N, C, H, W = x_nchw.shape
    Cmid = C // 4
    assert H % 8 == 0 and W % 8 == 0, "need three stride-2 pooling levels"

    dims = [(H, W)]
    for _ in range(3):
        h, w = dims[-1]
        dims.append(((h - 1) // 2 + 1, (w - 1) // 2 + 1))
    Ms = [N * h * w for h, w in dims]
    Mps = [max(_LANE, _round_up(m, _LANE)) for m in Ms]

    masks = [_tap_masks(N, h, w, mp) for (h, w), mp in zip(dims, Mps)]
    shifts = [_tap_shifts(w, mp) for (h, w), mp in zip(dims, Mps)]
    sels = [_pool_select(N, dims[l][0], dims[l][1], Mps[l], Mps[l + 1])
            for l in range(3)]
    ups = [_upsample_matrix(N, dims[l + 1][0], dims[l + 1][1],
                            dims[l][0], dims[l][1], Mps[l + 1], Mps[l])
           for l in range(3)]

    # NCHW -> lane-dense (C, N*H*W) layout; only XLA glue at the boundary.
    x0 = jnp.transpose(x_nchw.astype(jnp.float32), (1, 0, 2, 3)).reshape(C, Ms[0])
    if Mps[0] != Ms[0]:
        x0 = jnp.pad(x0, ((0, 0), (0, Mps[0] - Ms[0])))

    def rb(x, name, lvl):
        return _res_block(x, params[name], masks[lvl], shifts[lvl], C, Cmid)

    x1 = rb(x0, "first", 0)
    out_trunk = rb(rb(x1, "trunk1", 0), "trunk2", 0)

    out_mpool1 = _max_pool(x1, masks[0], sels[0], shifts[0], C)
    out_softmax1 = rb(out_mpool1, "softmax1", 1)
    out_skip1 = rb(out_softmax1, "skip1", 1)

    out_mpool2 = _max_pool(out_softmax1, masks[1], sels[1], shifts[1], C)
    out_softmax2 = rb(out_mpool2, "softmax2", 2)
    out_skip2 = rb(out_softmax2, "skip2", 2)

    out_mpool3 = _max_pool(out_softmax2, masks[2], sels[2], shifts[2], C)
    out_softmax3 = rb(rb(out_mpool3, "softmax3_1", 3), "softmax3_2", 3)

    out = _interp_add2(out_softmax3, ups[2], out_softmax2, out_skip2, C)
    out_softmax4 = rb(out, "softmax4", 2)

    out = _interp_add2(out_softmax4, ups[1], out_softmax1, out_skip1, C)
    out_softmax5 = rb(out, "softmax5", 1)

    out = _interp_gate(out_softmax5, ups[0], out_trunk,
                       params["softmax6_1"], params["softmax6_2"], C)
    out_last = rb(out, "last", 0)

    y = out_last[:, :Ms[0]].reshape(C, N, H, W)
    return jnp.transpose(y, (1, 0, 2, 3))


# =============================================================================
# Parameter init (inference-mode BN folded into per-channel scale/bias;
# conv weights flattened to the 1-D SMEM order used by the kernels).
# =============================================================================
def _init_preconv(key, cin, cout, ksize):
    k1, k2, k3, k4, k5 = jax.random.split(key, 5)
    gamma = 1.0 + 0.1 * jax.random.normal(k1, (cin,), jnp.float32)
    beta = 0.1 * jax.random.normal(k2, (cin,), jnp.float32)
    run_mean = 0.1 * jax.random.normal(k3, (cin,), jnp.float32)
    run_var = 1.0 + 0.1 * jax.random.uniform(k4, (cin,), jnp.float32)
    scale = gamma / jnp.sqrt(run_var + 1e-5)
    bias = beta - run_mean * scale
    if ksize == 1:
        w = jax.random.normal(k5, (cin, cout), jnp.float32) / np.sqrt(cin)
    else:
        w = jax.random.normal(k5, (3, 3, cin, cout), jnp.float32) / np.sqrt(9.0 * cin)
    return {"s": scale, "b": bias, "w": w.reshape(-1)}


def _init_resblock(key, c):
    mid = c // 4
    k1, k2, k3 = jax.random.split(key, 3)
    return {"c1": _init_preconv(k1, c, mid, 1),
            "c2": _init_preconv(k2, mid, mid, 3),
            "c3": _init_preconv(k3, mid, c, 1)}


def init_params(key, channels):
    names = ["first", "trunk1", "trunk2", "softmax1", "skip1",
             "softmax2", "skip2", "softmax3_1", "softmax3_2",
             "softmax4", "softmax5", "last"]
    keys = jax.random.split(key, len(names) + 2)
    params = {n: _init_resblock(k, channels) for n, k in zip(names, keys[:len(names)])}
    params["softmax6_1"] = _init_preconv(keys[-2], channels, channels, 1)
    params["softmax6_2"] = _init_preconv(keys[-1], channels, channels, 1)
    return params


# =============================================================================
# main
# =============================================================================
if __name__ == "__main__":
    _get_roll_sign()   # probe pltpu.roll convention once, before tracing

    key = jax.random.PRNGKey(0)
    k_x, k_p = jax.random.split(key)
    batch, channels, height, width = 2, 8, 16, 16   # size1=(16,16), size2=(8,8), size3=(4,4)
    x = jax.random.normal(k_x, (batch, channels, height, width), jnp.float32)
    params = init_params(k_p, channels)

    fwd = jax.jit(attention_module_stage1)
    out = fwd(x, params)
    out = jax.block_until_ready(out)
    assert out.shape == (batch, channels, height, width)
    assert bool(jnp.all(jnp.isfinite(out)))
    print("KERNEL_OK")
</pallas_src>

<mosaic_0001>
module attributes {stable_mosaic.version = 11 : i64} {
  func.func @kern(%arg0: memref<8x128xf32, #tpu.memory_space<vmem>>, %arg1: memref<8x128xf32, #tpu.memory_space<vmem>>) attributes {dimension_semantics = [], scalar_prefetch = 0 : i64, scratch_operands = 0 : i64, tpu.core_type = #tpu.core_type<tc>} {
    %c0 = arith.constant 0 : index
    %c0_0 = arith.constant 0 : index
    %0 = vector.load %arg0[%c0, %c0_0] : memref<8x128xf32, #tpu.memory_space<vmem>>, vector<8x128xf32>
    %c1_i32 = arith.constant 1 : i32
    %1 = tpu.dynamic_rotate %0 by %c1_i32 dim 1 : vector<8x128xf32>, i32 -> vector<8x128xf32>
    %c0_1 = arith.constant 0 : index
    %c0_2 = arith.constant 0 : index
    %2 = vector.load %arg1[%c0_1, %c0_2] : memref<8x128xf32, #tpu.memory_space<vmem>>, vector<8x128xf32>
    tpu.vector_store %arg1[%c0_1, %c0_2], %1 {strides = array<i32>} : memref<8x128xf32, #tpu.memory_space<vmem>>, vector<8x128xf32>,
    return
  }
}

</mosaic_0001>

<llo_original>
// kernel: tpu_custom_call.1
$region0: #{tpu_custom_call.1}
  #allocation0 [shape = 'u32[]', space=smem, size = 0x4, offset = 0x4, fixed_abs, tag = 'smem constant byte address 0x4 - core index']
  #allocation1 [shape = 'u32[144,128]{1,0:T(1,128)}', space=vmem, size = 0x12000, scoped, tag = 'internal scratch']
  %s0 = inlined_call_operand.hbm [shape: f32[8,128], index: 0, kind: input, shape index: {}]
  %s1 = inlined_call_operand.hbm [shape: f32[8,128], index: 1, kind: output, shape index: {}]
  %s2 = sld [smem:[#allocation0]]
  $region18: #{tpu_custom_call.1} parent=0
    _
  %s4 = ssub.s32 1, %s2
  %s5 = scalar_select 0, %s4, %s2
  $region1: #{tpu_custom_call.1} parent=0
    #allocation2 [shape = 'u8[4096]{0}', space=vmem, size = 0x1000, scoped, tag = 'input window, operand 0, single buffered']
    #allocation3 [shape = 's32[1]{0}', space=sflag, size = 0x4, scoped, tag = 'scoped memory for tpu_custom_call.1']
    #allocation4 [shape = 's32[1]{0}', space=sflag, size = 0x4, scoped, tag = 'scoped memory for tpu_custom_call.1']
    #allocation5 [shape = 'u8[4096]{0}', space=vmem, size = 0x1000, scoped, tag = 'output window, operand 0, single buffered']
    %6 = vsyncpa [#allocation3], 0
    %7 = vsyncpa [#allocation4], 0
    // Predicated region
    $region2: #{tpu_custom_call.1} parent=1 // pred_check
      _
    $region3: #{tpu_custom_call.1} parent=1 // pred_check_branch
      %9 = sbr.rel (0) target = $region5
    $region4: #{tpu_custom_call.1} parent=1 // pred_region
      %s11 = ssub.s32 128, 128
      %12 = vsyncadd [#allocation3], %s11
      %s14 = sshll.u32 [#allocation2], 4
      %s15 = int_to_ptr.vmem [resolvable:$true] %s14
      %17 = dma.hbm_to_vmem [thread:$0]  %s0, 128, %s15, [#allocation3]
    $region5: #{tpu_custom_call.1} parent=1 // pred_fallthru
      _
    // Predicated region
    $region6: #{tpu_custom_call.1} parent=1 // pred_check
      _
    $region7: #{tpu_custom_call.1} parent=1 // pred_check_branch
      %19 = sbr.rel (0) target = $region9
    $region8: #{tpu_custom_call.1} parent=1 // pred_region
      %20 = dma.done [#allocation3], 128
    $region9: #{tpu_custom_call.1} parent=1 // pred_fallthru
      _
    %v21 = vld [vmem:[#allocation2] sm:$0xff]
    %22 = vrot.lane.b32.xlu0 %v21, 1
    %v23 = vpop.permute.xlu0 %22
    %24 = vst [vmem:[#allocation5] sm:$0xff] %v23
    // Predicated region
    $region10: #{tpu_custom_call.1} parent=1 // pred_check
      _
    $region11: #{tpu_custom_call.1} parent=1 // pred_check_branch
      %26 = sbr.rel (0) target = $region13
    $region12: #{tpu_custom_call.1} parent=1 // pred_region
      %s28 = ssub.s32 128, 128
      %29 = vsyncadd [#allocation4], %s28
      %s31 = sshll.u32 [#allocation5], 4
      %s32 = int_to_ptr.vmem [resolvable:$true] %s31
      %34 = dma.vmem_to_hbm [thread:$0]  %s32, 128, %s1, [#allocation4]
    $region13: #{tpu_custom_call.1} parent=1 // pred_fallthru
      _
    // Predicated region
    $region14: #{tpu_custom_call.1} parent=1 // pred_check
      _
    $region15: #{tpu_custom_call.1} parent=1 // pred_check_branch
      %36 = sbr.rel (0) target = $region17
    $region16: #{tpu_custom_call.1} parent=1 // pred_region
      %37 = dma.done [#allocation4], 128
    $region17: #{tpu_custom_call.1} parent=1 // pred_fallthru
      _
    %38 = vsyncpa [#allocation3], 1
    %39 = vsyncpa [#allocation4], 1

</llo_original>
